<compile_context>
chip_gen: v5e
topology: v5e:2x2
jax: 0.10.0
libtpu: 0.0.40
codegen_flags: <defaults>
</compile_context>

<pallas_src>
import functools

import jax
import jax.numpy as jnp
import numpy as np
from jax import lax
from jax.experimental import pallas as pl
from jax.experimental.pallas import tpu as pltpu


_NEG_BIG = -1e30  # finite "-inf": fully-masked KV blocks never produce NaN


# ------------------------------------------------------------------
# helpers
# ------------------------------------------------------------------
def _pick_tile(dim, cap, aligns=(128, 8)):
    """Largest tile <= cap that exactly divides `dim` and is a multiple of one
    of `aligns` (tried in order); falls back to the full dimension (always a
    legal block shape).
    TODO(synk): prefer a cdiv grid + padding for awkward dims instead of the
    full-dim fallback."""
    if dim <= cap:
        return dim
    for align in aligns:
        t = (cap // align) * align
        while t >= align:
            if dim % t == 0:
                return t
            t -= align
    return dim


# ------------------------------------------------------------------
# Tiled linear:  y = x @ W + b   (W stored pre-transposed (Din, Dout), bf16)
# ------------------------------------------------------------------
def _linear_kernel(x_ref, w_ref, b_ref, o_ref):
    # bf16 operands -> MXU native; f32 accumulation; bias added once in f32.
    x = x_ref[...].astype(jnp.bfloat16)
    w = w_ref[...].astype(jnp.bfloat16)          # no-op: weights stored bf16
    acc = jnp.dot(x, w, preferred_element_type=jnp.float32)
    o_ref[...] = (acc + b_ref[...]).astype(o_ref.dtype)


def pallas_linear(x2d, w_t, b, *, tm_cap=512, tn_cap=512):
    """x2d: (M, K) f32, w_t: (K, N) bf16 (pre-transposed), b: (N,) -> (M, N) f32.

    Whisper-sized K (<= 1280) is kept whole, so there is no reduction grid
    axis, no accumulator scratch and no init/finalize branches."""
    M, K = x2d.shape
    K2, N = w_t.shape
    assert K == K2
    tm = _pick_tile(M, tm_cap, (128, 8))
    tn = _pick_tile(N, tn_cap, (128,))
    b2d = b.reshape(1, N).astype(jnp.float32)
    grid = (M // tm, N // tn)
    return pl.pallas_call(
        _linear_kernel,
        out_shape=jax.ShapeDtypeStruct((M, N), jnp.float32),
        grid_spec=pltpu.PrefetchScalarGridSpec(
            num_scalar_prefetch=0,
            grid=grid,
            in_specs=[
                pl.BlockSpec((tm, K), lambda i, j: (i, 0)),
                pl.BlockSpec((K, tn), lambda i, j: (0, j)),
                pl.BlockSpec((1, tn), lambda i, j: (0, j)),
            ],
            out_specs=pl.BlockSpec((tm, tn), lambda i, j: (i, j)),
        ),
        compiler_params=pltpu.CompilerParams(
            dimension_semantics=("parallel", "parallel")),
    )(x2d, w_t, b2d)


# ------------------------------------------------------------------
# Flash-style attention: grid (B, Tq/tq, Tk/tkv), KV axis = online softmax.
# All heads of one (b, q-tile) are processed per step; per-head scores are
# stacked along sublanes so the softmax update runs once per step.
# ------------------------------------------------------------------
def _flash_attention_kernel(*refs, n_head, scale, has_mask, with_w):
    idx = 0
    q_ref = refs[idx]; idx += 1
    k_ref = refs[idx]; idx += 1
    v_ref = refs[idx]; idx += 1
    mask_ref = None
    if has_mask:
        mask_ref = refs[idx]; idx += 1
    wv_ref = refs[idx]; idx += 1
    w_ref = None
    if with_w:
        w_ref = refs[idx]; idx += 1
    m_sc, l_sc, acc_sc = refs[idx], refs[idx + 1], refs[idx + 2]

    ki = pl.program_id(2)

    @pl.when(ki == 0)
    def _init():
        m_sc[...] = jnp.full_like(m_sc, _NEG_BIG)
        l_sc[...] = jnp.zeros_like(l_sc)
        acc_sc[...] = jnp.zeros_like(acc_sc)

    H = n_head
    tq, D = q_ref.shape[1], q_ref.shape[2]
    tkv = k_ref.shape[1]
    hd = D // H

    # full 1/sqrt(hd) scale applied once to q (== hd^-0.25 on both q and k).
    q = (q_ref[0] * scale).astype(jnp.bfloat16)      # (tq,  D)
    k = k_ref[0].astype(jnp.bfloat16)                # (tkv, D)
    v = v_ref[0].astype(jnp.bfloat16)                # (tkv, D)
    mask = mask_ref[...] if has_mask else None       # (tq, tkv) additive, f32

    # per-head MXU score matmuls, stacked along sublanes -> (H*tq, tkv)
    s_list = []
    for h in range(H):
        lo, hi = h * hd, (h + 1) * hd
        s_h = lax.dot_general(q[:, lo:hi], k[:, lo:hi],
                              (((1,), (1,)), ((), ())),
                              preferred_element_type=jnp.float32)
        if mask is not None:
            s_h = s_h + mask
        s_list.append(s_h)
    s = jnp.concatenate(s_list, axis=0)              # (H*tq, tkv) f32

    # single online-softmax update for all heads
    m_prev = m_sc[...]
    m_new = jnp.maximum(m_prev, jnp.max(s, axis=-1, keepdims=True))
    alpha = jnp.exp(m_prev - m_new)
    p = jnp.exp(s - m_new)
    l_sc[...] = alpha * l_sc[...] + jnp.sum(p, axis=-1, keepdims=True)
    m_sc[...] = m_new

    p16 = p.astype(jnp.bfloat16)
    pv_list = [
        jnp.dot(p16[h * tq:(h + 1) * tq], v[:, h * hd:(h + 1) * hd],
                preferred_element_type=jnp.float32)
        for h in range(H)
    ]
    pv = jnp.concatenate(pv_list, axis=0)            # (H*tq, hd) f32
    acc_sc[...] = alpha * acc_sc[...] + pv

    @pl.when(ki == pl.num_programs(2) - 1)
    def _finalize():
        # normalization folded into one EUP reciprocal on the small accumulator
        inv_l = pl.reciprocal(l_sc[...], approx=True)    # (H*tq, 1)
        out = acc_sc[...] * inv_l                        # (H*tq, hd)
        wv_ref[0] = jnp.concatenate(
            [out[h * tq:(h + 1) * tq] for h in range(H)],
            axis=-1).astype(wv_ref.dtype)                # lane-dense (tq, D)
        if with_w:
            # Only reached with a single resident KV block (wrapper enforces
            # it), so p / l of this step are the full-row softmax already.
            inv_exact = 1.0 / l_sc[...]
            for h in range(H):
                sl = slice(h * tq, (h + 1) * tq)
                w_ref[0, h] = (p[sl] * inv_exact[sl]).astype(w_ref.dtype)


def pallas_attention(q_src, kv_src, mask, n_head, d_model, *,
                     q_blk, k_blk, v_blk, with_w,
                     tq_cap=256, tkv_cap=512):
    """q_src: (B, Tq, nq*D), kv_src: (B, Tk, nkv*D).  q/k/v are addressed as
    last-dim BlockSpec block offsets q_blk/k_blk/v_blk of width D, so fused
    projection buffers are consumed directly (never sliced in HBM).
    Returns (wv (B,Tq,D) f32, w (B,H,Tq,Tk) f32 or None)."""
    B, Tq = q_src.shape[0], q_src.shape[1]
    Tk = kv_src.shape[1]
    D = d_model
    hd = D // n_head
    scale = 1.0 / float(np.sqrt(hd))
    has_mask = mask is not None

    tq = _pick_tile(Tq, tq_cap, (128, 8))
    if with_w:
        # Exact attention maps need full-row normalization, so the whole Tk
        # stays resident for this (alignment-head / debug) path only.
        # TODO(synk): two-pass variant for very long Tk on v7x.
        tkv = Tk
    else:
        tkv = _pick_tile(Tk, tkv_cap, (128,))
    num_kv = Tk // tkv
    grid = (B, Tq // tq, num_kv)

    in_specs = [
        pl.BlockSpec((1, tq, D), lambda b, qi, ki, blk=q_blk: (b, qi, blk)),
        pl.BlockSpec((1, tkv, D), lambda b, qi, ki, blk=k_blk: (b, ki, blk)),
        pl.BlockSpec((1, tkv, D), lambda b, qi, ki, blk=v_blk: (b, ki, blk)),
    ]
    args = [q_src, kv_src, kv_src]
    if has_mask:
        in_specs.append(pl.BlockSpec((tq, tkv), lambda b, qi, ki: (qi, ki)))
        args.append(mask)

    out_shape = [jax.ShapeDtypeStruct((B, Tq, D), jnp.float32)]
    out_specs = [pl.BlockSpec((1, tq, D), lambda b, qi, ki: (b, qi, 0))]
    if with_w:
        out_shape.append(jax.ShapeDtypeStruct((B, n_head, Tq, Tk), jnp.float32))
        out_specs.append(
            pl.BlockSpec((1, n_head, tq, Tk), lambda b, qi, ki: (b, 0, qi, 0)))

    kernel = functools.partial(_flash_attention_kernel, n_head=n_head,
                               scale=scale, has_mask=has_mask, with_w=with_w)

    res = pl.pallas_call(
        kernel,
        out_shape=tuple(out_shape),
        grid_spec=pltpu.PrefetchScalarGridSpec(
            num_scalar_prefetch=0,
            grid=grid,
            in_specs=in_specs,
            out_specs=tuple(out_specs),
            scratch_shapes=[
                pltpu.VMEM((n_head * tq, 1), jnp.float32),    # running max
                pltpu.VMEM((n_head * tq, 1), jnp.float32),    # running sum
                pltpu.VMEM((n_head * tq, hd), jnp.float32),   # running wv acc
            ],
        ),
        compiler_params=pltpu.CompilerParams(
            dimension_semantics=("parallel", "parallel", "arbitrary"),
            vmem_limit_bytes=64 * 1024 * 1024),
    )(*args)

    if not isinstance(res, (tuple, list)):
        res = (res,)
    wv = res[0]
    w = res[1] if with_w else None
    return wv, w


# ------------------------------------------------------------------
# Module wrapper (parameter setup + metadata reshapes are plain-JAX glue)
# ------------------------------------------------------------------
class MultiHeadAttention:
    """Pallas port of whisper MultiHeadAttention.forward."""

    def __init__(self, n_state: int, n_head: int, key):
        assert n_state % n_head == 0
        self.n_state = n_state
        self.n_head = n_head
        ks = jax.random.split(key, 7)
        s = 1.0 / np.sqrt(n_state)
        u = lambda k, shape: jax.random.uniform(k, shape, jnp.float32, -s, s)
        # f32 master weights in PyTorch nn.Linear layout (out, in) -- used by
        # the pure-JAX reference.
        self.wq, self.bq = u(ks[0], (n_state, n_state)), u(ks[1], (n_state,))
        self.wk = u(ks[2], (n_state, n_state))                  # key: no bias
        self.wv, self.bv = u(ks[3], (n_state, n_state)), u(ks[4], (n_state,))
        self.wo, self.bo = u(ks[5], (n_state, n_state)), u(ks[6], (n_state,))
        zero = jnp.zeros((n_state,), jnp.float32)
        # Pre-transposed (Din, Dout) bf16 weights; Q/K/V fused (K/V fused for
        # cross-attention) so input activations stream from HBM once.
        self.wq_t = self.wq.T.astype(jnp.bfloat16)
        self.wo_t = self.wo.T.astype(jnp.bfloat16)
        self.w_qkv_t = jnp.concatenate(
            [self.wq.T, self.wk.T, self.wv.T], axis=1).astype(jnp.bfloat16)
        self.b_qkv = jnp.concatenate([self.bq, zero, self.bv])
        self.w_kv_t = jnp.concatenate(
            [self.wk.T, self.wv.T], axis=1).astype(jnp.bfloat16)
        self.b_kv = jnp.concatenate([zero, self.bv])

    def __call__(self, x, xa=None, mask=None, return_attn=True):
        # TODO(synk): kv_cache path (module-keyed dict filled by torch forward
        # hooks) has no clean Pallas equivalent; fresh-projection path only.
        B, Tq, D = x.shape
        H = self.n_head

        if xa is None:
            # fused Q/K/V projection; the fused buffer is consumed directly by
            # the attention kernel via last-dim block offsets (never sliced).
            qkv = pallas_linear(x.reshape(-1, D), self.w_qkv_t, self.b_qkv)
            qkv = qkv.reshape(B, Tq, 3 * D)
            q_src, kv_src = qkv, qkv
            q_blk, k_blk, v_blk = 0, 1, 2
            Tk = Tq
        else:
            Tk = xa.shape[1]
            q_src = pallas_linear(x.reshape(-1, D), self.wq_t,
                                  self.bq).reshape(B, Tq, D)
            kv_src = pallas_linear(xa.reshape(-1, D), self.w_kv_t,
                                   self.b_kv).reshape(B, Tk, 2 * D)
            q_blk, k_blk, v_blk = 0, 0, 1

        if mask is not None:
            # Equivalent to the reference's mask[:n_ctx, :n_ctx] (Whisper only
            # masks the self-attention path where Tq == Tk).
            m2d = mask[:Tq, :Tk].astype(jnp.float32)
        else:
            m2d = None

        wv, w = pallas_attention(q_src, kv_src, m2d, H, D,
                                 q_blk=q_blk, k_blk=k_blk, v_blk=v_blk,
                                 with_w=return_attn)
        out = pallas_linear(wv.reshape(-1, D), self.wo_t,
                            self.bo).reshape(B, Tq, D)
        # PyTorch forward returns (out(wv), w) where w is the softmax map.
        return out, w


# ------------------------------------------------------------------
# Pure-JAX reference (mirrors the PyTorch forward exactly, in f32)
# ------------------------------------------------------------------
def ref_forward(mha, x, xa=None, mask=None):
    src = x if xa is None else xa
    q = x @ mha.wq.T + mha.bq
    k = src @ mha.wk.T
    v = src @ mha.wv.T + mha.bv
    B, Tq, D = q.shape
    Tk = k.shape[1]
    H = mha.n_head
    hd = D // H
    scale = float(hd) ** (-0.25)
    qh = jnp.transpose(q.reshape(B, Tq, H, hd), (0, 2, 1, 3)) * scale
    kh = jnp.transpose(k.reshape(B, Tk, H, hd), (0, 2, 3, 1)) * scale
    vh = jnp.transpose(v.reshape(B, Tk, H, hd), (0, 2, 1, 3))
    qk = qh @ kh
    if mask is not None:
        qk = qk + mask[:Tq, :Tk]
    w = jax.nn.softmax(qk.astype(jnp.float32), axis=-1)
    wv = jnp.transpose(w @ vh, (0, 2, 1, 3)).reshape(B, Tq, D)
    out = wv @ mha.wo.T + mha.bo
    return out, w


# ------------------------------------------------------------------
if __name__ == "__main__":
    root = jax.random.PRNGKey(0)
    kp, kx, kxa, kx2 = jax.random.split(root, 4)

    # Kernels compute matmuls in bf16 (f32 accumulation); compare against the
    # f32 reference at bf16-appropriate tolerances.
    RTOL, ATOL = 2e-2, 2e-2

    # --- config A: decoder-style masked self-attention, attention map returned
    B, T, n_state, n_head = 2, 16, 128, 4
    mha = MultiHeadAttention(n_state, n_head, kp)
    x = jax.random.normal(kx, (B, T, n_state), jnp.float32)
    causal = jnp.triu(jnp.full((T, T), -jnp.inf, jnp.float32), k=1)

    out, attn_w = mha(x, mask=causal, return_attn=True)
    out = jax.block_until_ready(out)
    attn_w = jax.block_until_ready(attn_w)
    ref_out, ref_w = ref_forward(mha, x, mask=causal)
    assert out.shape == (B, T, n_state)
    assert attn_w.shape == (B, n_head, T, T)
    np.testing.assert_allclose(np.asarray(out), np.asarray(ref_out),
                               rtol=RTOL, atol=ATOL)
    np.testing.assert_allclose(np.asarray(attn_w), np.asarray(ref_w),
                               rtol=RTOL, atol=ATOL)

    # --- config A2: cross-attention (encoder K/V), no mask, map returned
    Txa = 24
    xa = jax.random.normal(kxa, (B, Txa, n_state), jnp.float32)
    out_c, w_c = mha(x, xa=xa, return_attn=True)
    out_c = jax.block_until_ready(out_c)
    ref_out_c, ref_w_c = ref_forward(mha, x, xa=xa)
    assert w_c.shape == (B, n_head, T, Txa)
    np.testing.assert_allclose(np.asarray(out_c), np.asarray(ref_out_c),
                               rtol=RTOL, atol=ATOL)
    np.testing.assert_allclose(np.asarray(w_c), np.asarray(ref_w_c),
                               rtol=RTOL, atol=ATOL)

    # --- config B: longer masked self-attention, exercises the flash KV
    # tiling (5 KV blocks x 5 Q tiles) with the attention map gated off.
    B2, T2 = 1, 640
    x2 = jax.random.normal(kx2, (B2, T2, n_state), jnp.float32)
    causal2 = jnp.triu(jnp.full((T2, T2), -jnp.inf, jnp.float32), k=1)
    out2, w2 = mha(x2, mask=causal2, return_attn=False)
    out2 = jax.block_until_ready(out2)
    assert w2 is None
    ref_out2, _ = ref_forward(mha, x2, mask=causal2)
    np.testing.assert_allclose(np.asarray(out2), np.asarray(ref_out2),
                               rtol=RTOL, atol=ATOL)

    print("KERNEL_OK")
</pallas_src>

<mosaic_0001>
module attributes {stable_mosaic.version = 11 : i64} {
  func.func @_linear_kernel(%arg0: i32, %arg1: i32, %arg2: memref<32x128xf32, #tpu.memory_space<vmem>>, %arg3: memref<128x384xbf16, #tpu.memory_space<vmem>>, %arg4: memref<1x384xf32, #tpu.memory_space<vmem>>, %arg5: memref<32x384xf32, #tpu.memory_space<vmem>>) attributes {dimension_semantics = [#tpu.dimension_semantics<parallel>, #tpu.dimension_semantics<parallel>], iteration_bounds = array<i64: 1, 1>, scalar_prefetch = 0 : i64, scratch_operands = 0 : i64, tpu.core_type = #tpu.core_type<tc>, window_params = [{transform_indices = @transform_0, window_bounds = array<i64: 32, 128>}, {transform_indices = @transform_1, window_bounds = array<i64: 128, 384>}, {transform_indices = @transform_2, window_bounds = array<i64: 1, 384>}, {transform_indices = @transform_3, window_bounds = array<i64: 32, 384>}]} {
    %c0 = arith.constant 0 : index
    %c0_0 = arith.constant 0 : index
    %0 = vector.load %arg2[%c0, %c0_0] : memref<32x128xf32, #tpu.memory_space<vmem>>, vector<32x128xf32>
    %1 = arith.truncf %0 : vector<32x128xf32> to vector<32x128xbf16>
    %c0_1 = arith.constant 0 : index
    %c0_2 = arith.constant 0 : index
    %2 = vector.load %arg3[%c0_1, %c0_2] : memref<128x384xbf16, #tpu.memory_space<vmem>>, vector<128x384xbf16>
    %cst = arith.constant dense<0.000000e+00> : vector<32x384xf32>
    %3 = tpu.matmul %1, %2, %cst {dimension_numbers = #tpu.dot_dimension_numbers<[1], [0], [0], [1], [0, 0, 1, 1], [], []>} : vector<32x128xbf16>, vector<128x384xbf16>, vector<32x384xf32> -> vector<32x384xf32>
    %c0_3 = arith.constant 0 : index
    %c0_4 = arith.constant 0 : index
    %4 = vector.load %arg4[%c0_3, %c0_4] : memref<1x384xf32, #tpu.memory_space<vmem>>, vector<1x384xf32>
    %5 = vector.broadcast %4 : vector<1x384xf32> to vector<32x384xf32>
    %6 = arith.addf %3, %5 : vector<32x384xf32>
    %c0_5 = arith.constant 0 : index
    %c0_6 = arith.constant 0 : index
    %7 = vector.load %arg5[%c0_5, %c0_6] : memref<32x384xf32, #tpu.memory_space<vmem>>, vector<32x384xf32>
    tpu.vector_store %arg5[%c0_5, %c0_6], %6 {strides = array<i32>} : memref<32x384xf32, #tpu.memory_space<vmem>>, vector<32x384xf32>,
    return
  }
  func.func @transform_0(%arg0: i32, %arg1: i32) -> (i32, i32) {
    %c0_i32 = arith.constant 0 : i32
    %c0_i32_0 = arith.constant 0 : i32
    return %arg0, %c0_i32 : i32, i32
  }
  func.func @transform_1(%arg0: i32, %arg1: i32) -> (i32, i32) {
    %c0_i32 = arith.constant 0 : i32
    %c0_i32_0 = arith.constant 0 : i32
    return %c0_i32, %arg1 : i32, i32
  }
  func.func @transform_2(%arg0: i32, %arg1: i32) -> (i32, i32) {
    %c0_i32 = arith.constant 0 : i32
    %c0_i32_0 = arith.constant 0 : i32
    return %c0_i32, %arg1 : i32, i32
  }
  func.func @transform_3(%arg0: i32, %arg1: i32) -> (i32, i32) {
    %c0_i32 = arith.constant 0 : i32
    return %arg0, %arg1 : i32, i32
  }
}

</mosaic_0001>

<llo_original>
// kernel: tpu_custom_call.1
$region0: #{tpu_custom_call.1}
  #allocation0 [shape = 'u32[]', space=smem, size = 0x4, offset = 0x4, fixed_abs, tag = 'smem constant byte address 0x4 - core index']
  #allocation1 [shape = 'u32[72,128]{1,0:T(1,128)}', space=vmem, size = 0x9000, scoped, tag = 'internal scratch']
  %s0 = inlined_call_operand.hbm [shape: f32[32,128], index: 0, kind: input, shape index: {}]
  %s1 = inlined_call_operand.hbm [shape: bf16[128,384], index: 1, kind: input, shape index: {}]
  %s2 = inlined_call_operand.hbm [shape: f32[1,384], index: 2, kind: input, shape index: {}]
  %s3 = inlined_call_operand.hbm [shape: f32[32,384], index: 3, kind: output, shape index: {}]
  %s4 = sld [smem:[#allocation0]]
  $region34: #{tpu_custom_call.1} parent=0
    _
  %s6 = ssub.s32 1, %s4
  %s7 = scalar_select 0, %s6, %s4
  $region1: #{tpu_custom_call.1} parent=0
    #allocation2 [shape = 'u8[16384]{0}', space=vmem, size = 0x4000, scoped, tag = 'input window, operand 0, single buffered']
    #allocation3 [shape = 's32[1]{0}', space=sflag, size = 0x4, scoped, tag = 'scoped memory for tpu_custom_call.1']
    #allocation4 [shape = 's32[1]{0}', space=sflag, size = 0x4, scoped, tag = 'scoped memory for tpu_custom_call.1']
    #allocation5 [shape = 'u8[98304]{0}', space=vmem, size = 0x18000, scoped, tag = 'input window, operand 1, single buffered']
    #allocation6 [shape = 's32[1]{0}', space=sflag, size = 0x4, scoped, tag = 'scoped memory for tpu_custom_call.1']
    #allocation7 [shape = 'u8[1536]{0}', space=vmem, size = 0x800, scoped, tag = 'input window, operand 2, single buffered']
    #allocation8 [shape = 'u8[49152]{0}', space=vmem, size = 0xc000, scoped, tag = 'output window, operand 0, single buffered']
    %8 = vsyncpa [#allocation3], 0
    %9 = vsyncpa [#allocation6], 0
    %10 = vsyncpa [#allocation4], 0
    // Predicated region
    $region2: #{tpu_custom_call.1} parent=1 // pred_check
      _
    $region3: #{tpu_custom_call.1} parent=1 // pred_check_branch
      %12 = sbr.rel (0) target = $region5
    $region4: #{tpu_custom_call.1} parent=1 // pred_region
      %14 = vsyncadd [#allocation3], 0
      %s15 = sshll.u32 %s0, 4
      %s16 = int_to_ptr.hbm [resolvable:$true] %s15
      %s17 = sshll.u32 [#allocation2], 4
      %s18 = int_to_ptr.vmem [resolvable:$true] %s17
      %23 = dma.hbm_to_vmem [thread:$0]  %s16, 512, %s18, [#allocation3], 128, 128, 8
    $region5: #{tpu_custom_call.1} parent=1 // pred_fallthru
      _
    // Predicated region
    $region6: #{tpu_custom_call.1} parent=1 // pred_check
      _
    $region7: #{tpu_custom_call.1} parent=1 // pred_check_branch
      %25 = sbr.rel (0) target = $region9
    $region8: #{tpu_custom_call.1} parent=1 // pred_region
      %27 = vsyncadd [#allocation6], 0
      %s28 = sshll.u32 %s1, 4
      %s29 = int_to_ptr.hbm [resolvable:$true] %s28
      %s30 = sshll.u32 [#allocation5], 4
      %s31 = int_to_ptr.vmem [resolvable:$true] %s30
      %36 = dma.hbm_to_vmem [thread:$0]  %s29, 3072, %s31, [#allocation6], 192, 192, 12
    $region9: #{tpu_custom_call.1} parent=1 // pred_fallthru
      _
    // Predicated region
    $region10: #{tpu_custom_call.1} parent=1 // pred_check
      _
    $region11: #{tpu_custom_call.1} parent=1 // pred_check_branch
      %38 = sbr.rel (0) target = $region13
    $region12: #{tpu_custom_call.1} parent=1 // pred_region
      %40 = vsyncadd [#allocation6], 0
      %s42 = sshll.u32 %s2, 4
      %s43 = int_to_ptr.hbm [resolvable:$true] %s42
      %s44 = sshll.u32 [#allocation7], 4
      %s45 = int_to_ptr.vmem [resolvable:$true] %s44
      %47 = dma.hbm_to_vmem [thread:$0]  %s43, 48, %s45, [#allocation6]
    $region13: #{tpu_custom_call.1} parent=1 // pred_fallthru
      _
    // Predicated region
    $region14: #{tpu_custom_call.1} parent=1 // pred_check
      _
    $region15: #{tpu_custom_call.1} parent=1 // pred_check_branch
      %49 = sbr.rel (0) target = $region17
    $region16: #{tpu_custom_call.1} parent=1 // pred_region
      %51 = dma.done [#allocation3], 512
    $region17: #{tpu_custom_call.1} parent=1 // pred_fallthru
      _
    // Predicated region
    $region18: #{tpu_custom_call.1} parent=1 // pred_check
      _
    $region19: #{tpu_custom_call.1} parent=1 // pred_check_branch
      %53 = sbr.rel (0) target = $region21
    $region20: #{tpu_custom_call.1} parent=1 // pred_region
      %55 = dma.done [#allocation6], 3072
    $region21: #{tpu_custom_call.1} parent=1 // pred_fallthru
      _
    // Predicated region
    $region22: #{tpu_custom_call.1} parent=1 // pred_check
      _
    $region23: #{tpu_custom_call.1} parent=1 // pred_check_branch
      %57 = sbr.rel (0) target = $region25
    $region24: #{tpu_custom_call.1} parent=1 // pred_region
      %59 = dma.done [#allocation6], 48
    $region25: #{tpu_custom_call.1} parent=1 // pred_fallthru
      _
    %v60 = vld [vmem:[#allocation2] sm:$0xff]
    %v61 = vld [vmem:[#allocation2 + $0x8] sm:$0xff]
    %v62 = vld [vmem:[#allocation2 + $0x10] sm:$0xff]
    %v63 = vld [vmem:[#allocation2 + $0x18] sm:$0xff]
    %v64 = vpack.c.bf16 %v61, %v60
    %v65 = vpack.c.bf16 %v63, %v62
    %v66 = vld [vmem:[#allocation5] sm:$0xff]
    %v67 = vld [vmem:[#allocation5 + $0x8] sm:$0xf]
    %v68 = vld [vmem:[#allocation5 + $0xc] sm:$0xff]
    %v69 = vld [vmem:[#allocation5 + $0x14] sm:$0xf]
    %v70 = vld [vmem:[#allocation5 + $0x18] sm:$0xff]
    %v71 = vld [vmem:[#allocation5 + $0x20] sm:$0xf]
    %v72 = vld [vmem:[#allocation5 + $0x24] sm:$0xff]
    %v73 = vld [vmem:[#allocation5 + $0x2c] sm:$0xf]
    %v74 = vld [vmem:[#allocation5 + $0x30] sm:$0xff]
    %v75 = vld [vmem:[#allocation5 + $0x38] sm:$0xf]
    %v76 = vld [vmem:[#allocation5 + $0x3c] sm:$0xff]
    %v77 = vld [vmem:[#allocation5 + $0x44] sm:$0xf]
    %v78 = vld [vmem:[#allocation5 + $0x48] sm:$0xff]
    %v79 = vld [vmem:[#allocation5 + $0x50] sm:$0xf]
    %v80 = vld [vmem:[#allocation5 + $0x54] sm:$0xff]
    %v81 = vld [vmem:[#allocation5 + $0x5c] sm:$0xf]
    %v82 = vld [vmem:[#allocation5 + $0x60] sm:$0xff]
    %v83 = vld [vmem:[#allocation5 + $0x68] sm:$0xf]
    %v84 = vld [vmem:[#allocation5 + $0x6c] sm:$0xff]
    %v85 = vld [vmem:[#allocation5 + $0x74] sm:$0xf]
    %v86 = vld [vmem:[#allocation5 + $0x78] sm:$0xff]
    %v87 = vld [vmem:[#allocation5 + $0x80] sm:$0xf]
    %v88 = vld [vmem:[#allocation5 + $0x84] sm:$0xff]
    %v89 = vld [vmem:[#allocation5 + $0x8c] sm:$0xf]
    %v90 = vld [vmem:[#allocation5 + $0x90] sm:$0xff]
    %v91 = vld [vmem:[#allocation5 + $0x98] sm:$0xf]
    %v92 = vld [vmem:[#allocation5 + $0x9c] sm:$0xff]
    %v93 = vld [vmem:[#allocation5 + $0xa4] sm:$0xf]
    %v94 = vld [vmem:[#allocation5 + $0xa8] sm:$0xff]
    %v95 = vld [vmem:[#allocation5 + $0xb0] sm:$0xf]
    %v96 = vld [vmem:[#allocation5 + $0xb4] sm:$0xff]
    %v97 = vld [vmem:[#allocation5 + $0xbc] sm:$0xf]
    %v98 = vld [vmem:[#allocation7] sm:$0x7]
    %v100 = vperm.slane %v98, 0
    %v101 = vperm.slane %v98, 1
    %v102 = vperm.slane %v98, 2
    %v138 = vunpack.c.l.b16 %v66
    %v139 = vunpack.c.h.b16 %v66
    %v140 = vunpack.c.l.b16 %v67
    %v141 = vunpack.c.l.b16 %v68
    %v142 = vunpack.c.h.b16 %v68
    %v143 = vunpack.c.l.b16 %v69
    %v144 = vunpack.c.l.b16 %v70
    %v145 = vunpack.c.h.b16 %v70
    %v146 = vunpack.c.l.b16 %v71
    %v147 = vunpack.c.l.b16 %v72
    %v148 = vunpack.c.h.b16 %v72
    %v149 = vunpack.c.l.b16 %v73
    %v150 = vunpack.c.l.b16 %v74
    %v151 = vunpack.c.h.b16 %v74
    %v152 = vunpack.c.l.b16 %v75
    %v153 = vunpack.c.l.b16 %v76
    %v154 = vunpack.c.h.b16 %v76
    %v155 = vunpack.c.l.b16 %v77
    %v156 = vunpack.c.l.b16 %v78
    %v157 = vunpack.c.h.b16 %v78
    %v158 = vunpack.c.l.b16 %v79
    %v159 = vunpack.c.l.b16 %v80
    %v160 = vunpack.c.h.b16 %v80
    %v161 = vunpack.c.l.b16 %v81
    %v162 = vunpack.c.l.b16 %v82
    %v163 = vunpack.c.h.b16 %v82
    %v164 = vunpack.c.l.b16 %v83
    %v165 = vunpack.c.l.b16 %v84
    %v166 = vunpack.c.h.b16 %v84
    %v167 = vunpack.c.l.b16 %v85
    %v168 = vunpack.c.l.b16 %v86
    %v169 = vunpack.c.h.b16 %v86
    %v170 = vunpack.c.l.b16 %v87
    %v171 = vunpack.c.l.b16 %v88
    %v172 = vunpack.c.h.b16 %v88
    %v173 = vunpack.c.l.b16 %v89
    %v174 = vunpack.c.l.b16 %v90
    %v175 = vunpack.c.h.b16 %v90
    %v176 = vunpack.c.l.b16 %v91
    %v177 = vunpack.c.l.b16 %v92
    %v178 = vunpack.c.h.b16 %v92
    %v179 = vunpack.c.l.b16 %v93
    %v180 = vunpack.c.l.b16 %v94
    %v181 = vunpack.c.h.b16 %v94
    %v182 = vunpack.c.l.b16 %v95
    %v183 = vunpack.c.l.b16 %v96
    %v184 = vunpack.c.h.b16 %v96
    %v185 = vunpack.c.l.b16 %v97
    %v186 = vpack.c.b16 %v141, %v138
    %v187 = vpack.c.b16 %v142, %v139
    %v188 = vpack.c.b16 %v143, %v140
    %v189 = vpack.c.b16 %v147, %v144
    %v190 = vpack.c.b16 %v148, %v145
    %v191 = vpack.c.b16 %v149, %v146
    %v192 = vpack.c.b16 %v153, %v150
    %v193 = vpack.c.b16 %v154, %v151
    %v194 = vpack.c.b16 %v155, %v152
    %v195 = vpack.c.b16 %v159, %v156
    %v196 = vpack.c.b16 %v160, %v157
    %v197 = vpack.c.b16 %v161, %v158
    %v198 = vpack.c.b16 %v165, %v162
    %v199 = vpack.c.b16 %v166, %v163
    %v200 = vpack.c.b16 %v167, %v164
    %v201 = vpack.c.b16 %v171, %v168
    %v202 = vpack.c.b16 %v172, %v169
    %v203 = vpack.c.b16 %v173, %v170
    %v204 = vpack.c.b16 %v177, %v174
    %v205 = vpack.c.b16 %v178, %v175
    %v206 = vpack.c.b16 %v179, %v176
    %v207 = vpack.c.b16 %v183, %v180
    %v208 = vpack.c.b16 %v184, %v181
    %v209 = vpack.c.b16 %v185, %v182
    %234 = vmatpush.bf16.msra.mxu0 %v207
    %235 = vmatpush.bf16.msra.mxu0 %v204
    %236 = vmatpush.bf16.msra.mxu0 %v201
    %237 = vmatpush.bf16.msra.mxu0 %v198
    %238 = vmatpush.bf16.msra.mxu0 %v195
    %239 = vmatpush.bf16.msra.mxu0 %v192
    %240 = vmatpush.bf16.msra.mxu0 %v189
    %241 = vmatpush.bf16.msra.mxu0 %v186
    %242 = vmatmul.bf16.gmra.mxu0 %v64
    %v243 = vpop.f32.mrf.mxu0
    %v244 = vadd.f32 %v100, %v243
    %v245 = vpop.f32.mrf.mxu0
    %v246 = vadd.f32 %v100, %v245
    %247 = vmatmul.bf16.gmra.mxu0 %v65
    %v248 = vpop.f32.mrf.mxu0
    %v249 = vadd.f32 %v100, %v248
    %v250 = vpop.f32.mrf.mxu0
    %v251 = vadd.f32 %v100, %v250
    %252 = vdwg.mxu0
    %253 = vmatpush.bf16.msra.mxu0 %v208
    %254 = vmatpush.bf16.msra.mxu0 %v205
    %255 = vmatpush.bf16.msra.mxu0 %v202
    %256 = vmatpush.bf16.msra.mxu0 %v199
    %257 = vmatpush.bf16.msra.mxu0 %v196
    %258 = vmatpush.bf16.msra.mxu0 %v193
    %259 = vmatpush.bf16.msra.mxu0 %v190
    %260 = vmatpush.bf16.msra.mxu0 %v187
    %261 = vmatmul.bf16.gmra.mxu0 %v64
    %v262 = vpop.f32.mrf.mxu0
    %v263 = vadd.f32 %v101, %v262
    %v264 = vpop.f32.mrf.mxu0
    %v265 = vadd.f32 %v101, %v264
    %266 = vmatmul.bf16.gmra.mxu0 %v65
    %v267 = vpop.f32.mrf.mxu0
    %v268 = vadd.f32 %v101, %v267
    %v269 = vpop.f32.mrf.mxu0
    %v270 = vadd.f32 %v101, %v269
    %271 = vdwg.mxu0
    %272 = vmatpush.bf16.msra.mxu0 %v209
    %273 = vmatpush.bf16.msra.mxu0 %v206
    %274 = vmatpush.bf16.msra.mxu0 %v203
    %275 = vmatpush.bf16.msra.mxu0 %v200
    %276 = vmatpush.bf16.msra.mxu0 %v197
    %277 = vmatpush.bf16.msra.mxu0 %v194
    %278 = vmatpush.bf16.msra.mxu0 %v191
    %279 = vmatpush.bf16.msra.mxu0 %v188
    %280 = vmatmul.bf16.gmra.mxu0 %v64
    %v281 = vpop.f32.mrf.mxu0
    %v282 = vadd.f32 %v102, %v281
    %v283 = vpop.f32.mrf.mxu0
    %v284 = vadd.f32 %v102, %v283
    %285 = vmatmul.bf16.gmra.mxu0 %v65
    %v286 = vpop.f32.mrf.mxu0
    %v287 = vadd.f32 %v102, %v286
    %v288 = vpop.f32.mrf.mxu0
    %v289 = vadd.f32 %v102, %v288
    %290 = vdwg.mxu0
    %291 = vst [vmem:[#allocation8] sm:$0xff] %v244
    %292 = vst [vmem:[#allocation8 + $0x8] sm:$0xff] %v263
    %293 = vst [vmem:[#allocation8 + $0x10] sm:$0xff] %v282
    %294 = vst [vmem:[#allocation8 + $0x18] sm:$0xff] %v246
    %295 = vst [vmem:[#allocation8 + $0x20] sm:$0xff] %v265
    %296 = vst [vmem:[#allocation8 + $0x28] sm:$0xff] %v284
    %297 = vst [vmem:[#allocation8 + $0x30] sm:$0xff] %v249
    %298 = vst [vmem:[#allocation8 + $0x38] sm:$0xff] %v268
    %299 = vst [vmem:[#allocation8 + $0x40] sm:$0xff] %v287
    %300 = vst [vmem:[#allocation8 + $0x48] sm:$0xff] %v251
    %301 = vst [vmem:[#allocation8 + $0x50] sm:$0xff] %v270
    %302 = vst [vmem:[#allocation8 + $0x58] sm:$0xff] %v289
    // Predicated region
    $region26: #{tpu_custom_call.1} parent=1 // pred_check
      _
    $region27: #{tpu_custom_call.1} parent=1 // pred_check_branch
      %304 = sbr.rel (0) target = $region29
    $region28: #{tpu_custom_call.1} parent=1 // pred_region
      %306 = vsyncadd [#allocation4], 0
      %s307 = sshll.u32 [#allocation8], 4
      %s308 = int_to_ptr.vmem [resolvable:$true] %s307
      %s309 = sshll.u32 %s3, 4
      %s310 = int_to_ptr.hbm [resolvable:$true] %s309
      %315 = dma.vmem_to_hbm [thread:$0]  %s308, 1536, %s310, [#allocation4], 384, 384, 24
    $region29: #{tpu_custom_call.1} parent=1 // pred_fallthru
      _
    // Predicated region
    $region30: #{tpu_custom_call.1} parent=1 // pred_check
      _
    $region31: #{tpu_custom_call.1} parent=1 // pred_check_branch
      %317 = sbr.rel (0) target = $region33
    $region32: #{tpu_custom_call.1} parent=1 // pred_region
      %319 = dma.done [#allocation4], 1536
    $region33: #{tpu_custom_call.1} parent=1 // pred_fallthru
      _
    %320 = vsyncpa [#allocation3], 1
    %321 = vsyncpa [#allocation6], 1
    %322 = vsyncpa [#allocation4], 1

</llo_original>
